<compile_context>
chip_gen: v7x
topology: tpu7x:2x2x1
jax: 0.10.0
libtpu: 0.0.40
codegen_flags: <defaults>
</compile_context>

<pallas_src>
import functools

import jax
import jax.numpy as jnp
from jax import lax
from jax.experimental import pallas as pl
from jax.experimental.pallas import tpu as pltpu

LANES = 128
MAX_ROW_TILE = 2048         # (2048,128) f32 block = 1 MiB per input per buffer
_PAD_LOGIT = -1e4           # logit pad value -> exactly zero focal-BCE loss


def _focal_loss_kernel(pred_ref, true_ref, out_ref, *,
                       gamma, alpha, inner, row_tile, total_rows):
    c = pl.program_id(0)            # outer "parallel" chunk axis
    j = pl.program_id(1)            # inner (reduction) grid axis
    step = c * inner + j            # logical row-block index

    @pl.when(j == 0)
    def _():
        out_ref[...] = jnp.zeros_like(out_ref)

    x = pred_ref[...].astype(jnp.float32)
    y = true_ref[...].astype(jnp.float32)

    # One shared exponential for the stable BCE-with-logits AND sigmoid.
    e = jnp.exp(-jnp.abs(x))
    bce = jnp.maximum(x, 0.0) - x * y + jnp.log1p(e)
    inv1pe = pl.reciprocal(1.0 + e, approx=True)        # EUP vrcp (no Newton step)
    p = jnp.where(x >= 0.0, inv1pe, e * inv1pe)         # == sigmoid(x)

    # t == 1 - p_t, algebraically folded:  t = p + y*(1 - 2p)
    t = p + y * (1.0 - 2.0 * p)
    # alpha_factor = y*alpha + (1-y)*(1-alpha), constants folded at trace time.
    alpha_factor = (1.0 - alpha) + y * (2.0 * alpha - 1.0)

    if float(gamma) == 1.5:
        modulating_factor = t * jnp.sqrt(t)             # t**1.5 without pow
    elif float(gamma) == float(int(gamma)):
        modulating_factor = t ** int(gamma)
    else:
        modulating_factor = t ** gamma

    loss = bce * alpha_factor * modulating_factor

    def _accumulate(v):
        # Fold (row_tile,128) onto the (8,128) vreg-shaped partial sum with VPU
        # adds; the single expensive cross-lane/sublane reduce happens once in
        # the wrapper.
        out_ref[...] += v.reshape(-1, 8, LANES).sum(axis=0)

    # Interior blocks skip masking entirely; only the ragged final block (and
    # the all-masked duplicate block when the block count is odd) pays the
    # iota + compare + select.
    full_block = (step + 1) * row_tile <= total_rows

    @pl.when(full_block)
    def _():
        _accumulate(loss)

    @pl.when(jnp.logical_not(full_block))
    def _():
        rid = step * row_tile + lax.broadcasted_iota(jnp.int32, loss.shape, 0)
        _accumulate(jnp.where(rid < total_rows, loss, 0.0))


def focal_loss(pred, true, gamma=1.5, alpha=0.25, reduction="mean"):
    assert pred.shape == true.shape
    n = pred.size

    # Flatten to a lane-dense (total_rows, 128) slab. No row padding to a
    # row_tile multiple anymore: the ragged final row-block is masked in-kernel.
    rows_valid = pl.cdiv(n, LANES)
    total_rows = max(rows_valid, 8)          # keep >= 8 sublanes of physical rows
    padded_n = total_rows * LANES

    pred_flat = pred.reshape(-1)
    true_flat = true.reshape(-1)
    if padded_n != n:
        # Rare fallback (n % 128 != 0 or n < 1024 elements): pad with constants
        # that produce an exactly-zero focal-BCE contribution, so the padded
        # elements need no masking. Aligned inputs skip this copy entirely.
        pad = padded_n - n
        pred_flat = jnp.pad(pred_flat, (0, pad), constant_values=_PAD_LOGIT)
        true_flat = jnp.pad(true_flat, (0, pad), constant_values=0)
    pred2d = pred_flat.reshape(total_rows, LANES)   # native dtype; cast in kernel
    true2d = true_flat.reshape(total_rows, LANES)
    # TODO(synk): on v5e (HBM-bound) casting true2d to bf16 would cut one stream
    # in half; skipped to keep exact f32 target semantics (labels may be smoothed).

    if total_rows >= MAX_ROW_TILE:
        row_tile = MAX_ROW_TILE
    else:
        row_tile = (total_rows // 8) * 8     # largest multiple of 8 <= total_rows

    steps = pl.cdiv(total_rows, row_tile)    # number of real row blocks
    # Unconditional 2-way chunk split whenever there are >= 2 blocks so v7x's
    # two TensorCores can share the row range (no-op on v5e/v6e). Odd block
    # counts are handled by clamping the index_map; the duplicate block is fully
    # masked inside the kernel so it contributes exactly zero.
    num_chunks = 2 if steps >= 2 else 1
    inner = pl.cdiv(steps, num_chunks)

    kernel = functools.partial(
        _focal_loss_kernel, gamma=float(gamma), alpha=float(alpha),
        inner=inner, row_tile=row_tile, total_rows=total_rows)

    in_map = (lambda c, j, inner=inner, last=steps - 1:
              (jnp.minimum(c * inner + j, last), 0))

    partials = pl.pallas_call(
        kernel,
        out_shape=jax.ShapeDtypeStruct((num_chunks * 8, LANES), jnp.float32),
        grid_spec=pltpu.PrefetchScalarGridSpec(
            num_scalar_prefetch=0,
            grid=(num_chunks, inner),
            in_specs=[
                pl.BlockSpec((row_tile, LANES), in_map),
                pl.BlockSpec((row_tile, LANES), in_map),
            ],
            out_specs=pl.BlockSpec((8, LANES), lambda c, j: (c, 0)),
        ),
        compiler_params=pltpu.CompilerParams(
            # Leading chunk axis is independent ("parallel") for megacore/TC
            # sharding on v7x; trailing reduction axis is "arbitrary".
            dimension_semantics=("parallel", "arbitrary"),
            # Headroom for the larger (row_tile,128) elementwise temporaries at
            # row_tile=2048 (safe on all generations; v7x physical VMEM = 64 MiB).
            vmem_limit_bytes=48 * 1024 * 1024,
        ),
    )(pred2d, true2d)

    total = jnp.sum(partials)        # one tiny cross-lane reduce in XLA
    if reduction == "mean":
        return total / n
    elif reduction == "sum":
        return total
    else:
        # TODO(synk): reduction='none' (elementwise loss output) not implemented.
        raise NotImplementedError("Only 'mean' and 'sum' reductions supported.")


def focal_loss_ref(pred, true, gamma=1.5, alpha=0.25):
    x = pred.astype(jnp.float32)
    y = true.astype(jnp.float32)
    bce = jnp.maximum(x, 0.0) - x * y + jnp.log1p(jnp.exp(-jnp.abs(x)))
    p = jax.nn.sigmoid(x)
    p_t = y * p + (1 - y) * (1 - p)
    af = y * alpha + (1 - y) * (1 - alpha)
    mf = (1.0 - p_t) ** gamma
    return jnp.mean(bce * af * mf)


if __name__ == "__main__":
    key = jax.random.PRNGKey(0)
    k1, k2 = jax.random.split(key)
    # Example logits / targets (NCHW-like small shape).
    pred = jax.random.normal(k1, (2, 4, 16, 16), dtype=jnp.float32) * 2.0
    true = (jax.random.uniform(k2, (2, 4, 16, 16)) > 0.7).astype(jnp.float32)

    out = focal_loss(pred, true)
    out = jax.block_until_ready(out)

    ref = focal_loss_ref(pred, true)
    # Tolerance loosened vs a bit-exact reference because of the approx EUP
    # reciprocal used for sigmoid (relative error ~2^-12 per element).
    assert jnp.allclose(out, ref, rtol=5e-3, atol=1e-6), (out, ref)
    print("KERNEL_OK")
</pallas_src>

<mosaic_0001>
module attributes {stable_mosaic.version = 11 : i64} {
  func.func @_focal_loss_kernel(%arg0: i32, %arg1: i32, %arg2: memref<16x128xf32, #tpu.memory_space<vmem>>, %arg3: memref<16x128xf32, #tpu.memory_space<vmem>>, %arg4: memref<8x128xf32, #tpu.memory_space<vmem>>) attributes {dimension_semantics = [#tpu.dimension_semantics<parallel>, #tpu.dimension_semantics<arbitrary>], iteration_bounds = array<i64: 1, 1>, scalar_prefetch = 0 : i64, scratch_operands = 0 : i64, tpu.core_type = #tpu.core_type<tc>, window_params = [{transform_indices = @transform_0, window_bounds = array<i64: 16, 128>}, {transform_indices = @transform_1, window_bounds = array<i64: 16, 128>}, {transform_indices = @transform_2, window_bounds = array<i64: 8, 128>}]} {
    %c1_i32 = arith.constant 1 : i32
    %0 = arith.muli %arg0, %c1_i32 : i32
    %1 = arith.addi %0, %arg1 : i32
    %c0_i32 = arith.constant 0 : i32
    %2 = arith.cmpi eq, %arg1, %c0_i32 : i32
    %3 = arith.extui %2 : i1 to i32
    %c0_i32_0 = arith.constant 0 : i32
    %4 = arith.cmpi ne, %3, %c0_i32_0 : i32
    scf.if %4 {
      %cst_15 = arith.constant 0.000000e+00 : f32
      %46 = vector.broadcast %cst_15 : f32 to vector<8x128xf32>
      %c0_16 = arith.constant 0 : index
      %c0_17 = arith.constant 0 : index
      %47 = vector.load %arg4[%c0_16, %c0_17] : memref<8x128xf32, #tpu.memory_space<vmem>>, vector<8x128xf32>
      tpu.vector_store %arg4[%c0_16, %c0_17], %46 {strides = array<i32>} : memref<8x128xf32, #tpu.memory_space<vmem>>, vector<8x128xf32>,
    } else {
    }
    %c0 = arith.constant 0 : index
    %c0_1 = arith.constant 0 : index
    %5 = vector.load %arg2[%c0, %c0_1] : memref<16x128xf32, #tpu.memory_space<vmem>>, vector<16x128xf32>
    %c0_2 = arith.constant 0 : index
    %c0_3 = arith.constant 0 : index
    %6 = vector.load %arg3[%c0_2, %c0_3] : memref<16x128xf32, #tpu.memory_space<vmem>>, vector<16x128xf32>
    %7 = math.absf %5 : vector<16x128xf32>
    %cst = arith.constant 0.000000e+00 : f32
    %8 = vector.broadcast %cst : f32 to vector<16x128xf32>
    %9 = arith.subf %8, %7 : vector<16x128xf32>
    %10 = math.exp %9 : vector<16x128xf32>
    %cst_4 = arith.constant 0.000000e+00 : f32
    %11 = vector.broadcast %cst_4 : f32 to vector<16x128xf32>
    %12 = arith.maximumf %5, %11 : vector<16x128xf32>
    %13 = arith.mulf %5, %6 : vector<16x128xf32>
    %14 = arith.subf %12, %13 : vector<16x128xf32>
    %15 = math.log1p %10 : vector<16x128xf32>
    %16 = arith.addf %14, %15 : vector<16x128xf32>
    %cst_5 = arith.constant 1.000000e+00 : f32
    %17 = vector.broadcast %cst_5 : f32 to vector<16x128xf32>
    %18 = arith.addf %17, %10 : vector<16x128xf32>
    %19 = tpu.reciprocal %18 {approx = true} : vector<16x128xf32> -> vector<16x128xf32>
    %cst_6 = arith.constant 0.000000e+00 : f32
    %20 = vector.broadcast %cst_6 : f32 to vector<16x128xf32>
    %21 = arith.cmpf oge, %5, %20 : vector<16x128xf32>
    %22 = arith.mulf %10, %19 : vector<16x128xf32>
    %23 = arith.select %21, %19, %22 : vector<16x128xi1>, vector<16x128xf32>
    %cst_7 = arith.constant 2.000000e+00 : f32
    %24 = vector.broadcast %cst_7 : f32 to vector<16x128xf32>
    %25 = arith.mulf %24, %23 : vector<16x128xf32>
    %cst_8 = arith.constant 1.000000e+00 : f32
    %26 = vector.broadcast %cst_8 : f32 to vector<16x128xf32>
    %27 = arith.subf %26, %25 : vector<16x128xf32>
    %28 = arith.mulf %6, %27 : vector<16x128xf32>
    %29 = arith.addf %23, %28 : vector<16x128xf32>
    %cst_9 = arith.constant -5.000000e-01 : f32
    %30 = vector.broadcast %cst_9 : f32 to vector<16x128xf32>
    %31 = arith.mulf %6, %30 : vector<16x128xf32>
    %cst_10 = arith.constant 7.500000e-01 : f32
    %32 = vector.broadcast %cst_10 : f32 to vector<16x128xf32>
    %33 = arith.addf %32, %31 : vector<16x128xf32>
    %34 = math.sqrt %29 : vector<16x128xf32>
    %35 = arith.mulf %29, %34 : vector<16x128xf32>
    %36 = arith.mulf %16, %33 : vector<16x128xf32>
    %37 = arith.mulf %36, %35 : vector<16x128xf32>
    %c1_i32_11 = arith.constant 1 : i32
    %38 = arith.addi %1, %c1_i32_11 : i32
    %c16_i32 = arith.constant 16 : i32
    %39 = arith.muli %38, %c16_i32 : i32
    %c16_i32_12 = arith.constant 16 : i32
    %40 = arith.cmpi sle, %39, %c16_i32_12 : i32
    %41 = arith.extui %40 : i1 to i32
    %c0_i32_13 = arith.constant 0 : i32
    %42 = arith.cmpi ne, %41, %c0_i32_13 : i32
    scf.if %42 {
      %c0_15 = arith.constant 0 : index
      %c0_16 = arith.constant 0 : index
      %46 = vector.load %arg4[%c0_15, %c0_16] : memref<8x128xf32, #tpu.memory_space<vmem>>, vector<8x128xf32>
      %47 = vector.shape_cast %37 : vector<16x128xf32> to vector<2x8x128xf32>
      %cst_17 = arith.constant dense<0.000000e+00> : vector<8x128xf32>
      %48 = vector.multi_reduction <add>, %47, %cst_17 [0] : vector<2x8x128xf32> to vector<8x128xf32>
      %49 = arith.addf %46, %48 : vector<8x128xf32>
      %c0_18 = arith.constant 0 : index
      %c0_19 = arith.constant 0 : index
      %50 = vector.load %arg4[%c0_18, %c0_19] : memref<8x128xf32, #tpu.memory_space<vmem>>, vector<8x128xf32>
      tpu.vector_store %arg4[%c0_18, %c0_19], %49 {strides = array<i32>} : memref<8x128xf32, #tpu.memory_space<vmem>>, vector<8x128xf32>,
    } else {
    }
    %true = arith.constant true
    %43 = arith.xori %40, %true : i1
    %44 = arith.extui %43 : i1 to i32
    %c0_i32_14 = arith.constant 0 : i32
    %45 = arith.cmpi ne, %44, %c0_i32_14 : i32
    scf.if %45 {
      %c16_i32_15 = arith.constant 16 : i32
      %46 = arith.muli %1, %c16_i32_15 : i32
      %47 = tpu.iota {dimensions = array<i32: 0>} : vector<16x128xi32>
      %48 = vector.broadcast %46 : i32 to vector<16x128xi32>
      %49 = arith.addi %48, %47 : vector<16x128xi32>
      %c16_i32_16 = arith.constant 16 : i32
      %50 = vector.broadcast %c16_i32_16 : i32 to vector<16x128xi32>
      %51 = arith.cmpi slt, %49, %50 : vector<16x128xi32>
      %cst_17 = arith.constant 0.000000e+00 : f32
      %52 = vector.broadcast %cst_17 : f32 to vector<16x128xf32>
      %53 = arith.select %51, %37, %52 : vector<16x128xi1>, vector<16x128xf32>
      %c0_18 = arith.constant 0 : index
      %c0_19 = arith.constant 0 : index
      %54 = vector.load %arg4[%c0_18, %c0_19] : memref<8x128xf32, #tpu.memory_space<vmem>>, vector<8x128xf32>
      %55 = vector.shape_cast %53 : vector<16x128xf32> to vector<2x8x128xf32>
      %cst_20 = arith.constant dense<0.000000e+00> : vector<8x128xf32>
      %56 = vector.multi_reduction <add>, %55, %cst_20 [0] : vector<2x8x128xf32> to vector<8x128xf32>
      %57 = arith.addf %54, %56 : vector<8x128xf32>
      %c0_21 = arith.constant 0 : index
      %c0_22 = arith.constant 0 : index
      %58 = vector.load %arg4[%c0_21, %c0_22] : memref<8x128xf32, #tpu.memory_space<vmem>>, vector<8x128xf32>
      tpu.vector_store %arg4[%c0_21, %c0_22], %57 {strides = array<i32>} : memref<8x128xf32, #tpu.memory_space<vmem>>, vector<8x128xf32>,
    } else {
    }
    return
  }
  func.func @transform_0(%arg0: i32, %arg1: i32) -> (i32, i32) {
    %c1_i32 = arith.constant 1 : i32
    %0 = arith.muli %arg0, %c1_i32 : i32
    %1 = arith.addi %0, %arg1 : i32
    %c0_i32 = arith.constant 0 : i32
    %2 = arith.minsi %1, %c0_i32 : i32
    %c0_i32_0 = arith.constant 0 : i32
    %c0_i32_1 = arith.constant 0 : i32
    return %2, %c0_i32_0 : i32, i32
  }
  func.func @transform_1(%arg0: i32, %arg1: i32) -> (i32, i32) {
    %c1_i32 = arith.constant 1 : i32
    %0 = arith.muli %arg0, %c1_i32 : i32
    %1 = arith.addi %0, %arg1 : i32
    %c0_i32 = arith.constant 0 : i32
    %2 = arith.minsi %1, %c0_i32 : i32
    %c0_i32_0 = arith.constant 0 : i32
    %c0_i32_1 = arith.constant 0 : i32
    return %2, %c0_i32_0 : i32, i32
  }
  func.func @transform_2(%arg0: i32, %arg1: i32) -> (i32, i32) {
    %c0_i32 = arith.constant 0 : i32
    %c0_i32_0 = arith.constant 0 : i32
    return %arg0, %c0_i32 : i32, i32
  }
}

</mosaic_0001>

<llo_original>
// kernel: tpu_custom_call.1
$region0: #{tpu_custom_call.1}
  #allocation0 [shape = 'u32[]', space=smem, size = 0x4, offset = 0x4, fixed_abs, tag = 'smem constant byte address 0x4 - core index']
  #allocation1 [shape = 'u32[144,128]{1,0:T(1,128)}', space=vmem, size = 0x12000, scoped, tag = 'internal scratch']
  %s0 = inlined_call_operand.hbm [shape: f32[16,128], index: 0, kind: input, shape index: {}]
  %s1 = inlined_call_operand.hbm [shape: f32[16,128], index: 1, kind: input, shape index: {}]
  %s2 = inlined_call_operand.hbm [shape: f32[8,128], index: 2, kind: output, shape index: {}]
  %s3 = sld [smem:[#allocation0]]
  $region38: #{tpu_custom_call.1} parent=0
    _
  %s5 = ssub.s32 1, %s3
  %s6 = scalar_select 0, %s5, %s3
  $region1: #{tpu_custom_call.1} parent=0
    #allocation2 [shape = 'u8[8192]{0}', space=vmem, size = 0x2000, scoped, tag = 'input window, operand 0, single buffered']
    #allocation3 [shape = 's32[1]{0}', space=sflag, size = 0x4, scoped, tag = 'scoped memory for tpu_custom_call.1']
    #allocation4 [shape = 's32[1]{0}', space=sflag, size = 0x4, scoped, tag = 'scoped memory for tpu_custom_call.1']
    #allocation5 [shape = 'u8[8192]{0}', space=vmem, size = 0x2000, scoped, tag = 'input window, operand 1, single buffered']
    #allocation6 [shape = 's32[1]{0}', space=sflag, size = 0x4, scoped, tag = 'scoped memory for tpu_custom_call.1']
    #allocation7 [shape = 'u8[4096]{0}', space=vmem, size = 0x1000, scoped, tag = 'output window, operand 0, single buffered']
    %7 = vsyncpa [#allocation3], 0
    %8 = vsyncpa [#allocation6], 0
    %9 = vsyncpa [#allocation4], 0
    // Predicated region
    $region2: #{tpu_custom_call.1} parent=1 // pred_check
      _
    $region3: #{tpu_custom_call.1} parent=1 // pred_check_branch
      %11 = sbr.rel (0) target = $region5
    $region4: #{tpu_custom_call.1} parent=1 // pred_region
      %s12 = sadd.s32 0, 0
      %p13 = scmp.lt.s32.totalorder %s12, 0
      %s14 = scalar_select %p13, %s12, 0
      %s15 = smul.u32 2, %s14
      %s17 = ssub.s32 256, 256
      %18 = vsyncadd [#allocation3], %s17
      %s19 = smul.addr %s15, 128
      %s20 = scalar_lea.hbm %s0, %s19
      %s21 = sshll.u32 [#allocation2], 4
      %s22 = int_to_ptr.vmem [resolvable:$true] %s21
      %27 = dma.hbm_to_vmem [thread:$0]  %s20, 256, %s22, [#allocation3], 128, 128, 8
    $region5: #{tpu_custom_call.1} parent=1 // pred_fallthru
      _
    // Predicated region
    $region6: #{tpu_custom_call.1} parent=1 // pred_check
      _
    $region7: #{tpu_custom_call.1} parent=1 // pred_check_branch
      %29 = sbr.rel (0) target = $region9
    $region8: #{tpu_custom_call.1} parent=1 // pred_region
      %s30 = sadd.s32 0, 0
      %p31 = scmp.lt.s32.totalorder %s30, 0
      %s32 = scalar_select %p31, %s30, 0
      %s33 = smul.u32 2, %s32
      %s35 = ssub.s32 256, 256
      %36 = vsyncadd [#allocation6], %s35
      %s37 = smul.addr %s33, 128
      %s38 = scalar_lea.hbm %s1, %s37
      %s39 = sshll.u32 [#allocation5], 4
      %s40 = int_to_ptr.vmem [resolvable:$true] %s39
      %45 = dma.hbm_to_vmem [thread:$0]  %s38, 256, %s40, [#allocation6], 128, 128, 8
    $region9: #{tpu_custom_call.1} parent=1 // pred_fallthru
      _
    // Predicated region
    $region10: #{tpu_custom_call.1} parent=1 // pred_check
      _
    $region11: #{tpu_custom_call.1} parent=1 // pred_check_branch
      %47 = sbr.rel (0) target = $region13
    $region12: #{tpu_custom_call.1} parent=1 // pred_region
      %48 = dma.done [#allocation3], 256
    $region13: #{tpu_custom_call.1} parent=1 // pred_fallthru
      _
    // Predicated region
    $region14: #{tpu_custom_call.1} parent=1 // pred_check
      _
    $region15: #{tpu_custom_call.1} parent=1 // pred_check_branch
      %50 = sbr.rel (0) target = $region17
    $region16: #{tpu_custom_call.1} parent=1 // pred_region
      %51 = dma.done [#allocation6], 256
    $region17: #{tpu_custom_call.1} parent=1 // pred_fallthru
      _
    %s52 = sadd.s32 0, 0
    %p53 = scmp.lt.s32.totalorder %s52, 0
    %s54 = scalar_select %p53, %s52, 0
    %s55 = smul.u32 2, %s54
    %s56 = sadd.s32 0, 0
    %p57 = scmp.lt.s32.totalorder %s56, 0
    %s58 = scalar_select %p57, %s56, 0
    %s59 = smul.u32 2, %s58
    %s60 = sadd.s32 0, 0
    %p61 = scmp.eq.s32.totalorder 0, 0
    // Predicated region
    $region18: #{tpu_custom_call.1} parent=1 // pred_check
      %p62 = pneg %p61
    $region19: #{tpu_custom_call.1} parent=1 // pred_check_branch
      %64 = sbr.rel (%p62) target = $region21
    $region20: #{tpu_custom_call.1} parent=1 // pred_region
      %65 = vst [vmem:[#allocation7] sm:$0xff] 0.0
    $region21: #{tpu_custom_call.1} parent=1 // pred_fallthru
      _
    %v66 = vld [vmem:[#allocation2] sm:$0xff]
    %v67 = vld [vmem:[#allocation2 + $0x8] sm:$0xff]
    %v68 = vld [vmem:[#allocation5] sm:$0xff]
    %v69 = vld [vmem:[#allocation5 + $0x8] sm:$0xff]
    %v70 = vand.u32 2147483647, %v66
    %v71 = vand.u32 2147483647, %v67
    %v72 = vsub.f32 0.0, %v70
    %v73 = vsub.f32 0.0, %v71
    %v74 = vmul.f32 %v72, 1.442695
    %v75 = vpow.pop %v74
    %v76 = vmul.f32 %v73, 1.442695
    %v77 = vpow.pop %v76
    %v78 = vmax.f32 %v66, 0.0
    %v79 = vmax.f32 %v67, 0.0
    %v80 = vmul.f32 %v66, %v68
    %v81 = vmul.f32 %v67, %v69
    %v82 = vsub.f32 %v78, %v80
    %v83 = vsub.f32 %v79, %v81
    %v84 = vadd.f32 %v75, 1.0
    %v85 = vlog2.pop %v84
    %v86 = vmul.f32 %v85, 0.6931472
    %v87 = vmul.f32 -0.5, %v75
    %v88 = vadd.f32 %v87, 1.0
    %v89 = vmul.f32 %v88, %v75
    %v90 = vand.u32 2147483647, %v75
    %vm91 = vcmp.lt.f32.partialorder %v90, 0.0004427343
    %v92 = vsel %vm91, %v89, %v86
    %v93 = vadd.f32 %v77, 1.0
    %v94 = vlog2.pop %v93
    %v95 = vmul.f32 %v94, 0.6931472
    %v96 = vmul.f32 -0.5, %v77
    %v97 = vadd.f32 %v96, 1.0
    %v98 = vmul.f32 %v97, %v77
    %v99 = vand.u32 2147483647, %v77
    %vm100 = vcmp.lt.f32.partialorder %v99, 0.0004427343
    %v101 = vsel %vm100, %v98, %v95
    %v102 = vadd.f32 %v82, %v92
    %v103 = vadd.f32 %v83, %v101
    %v104 = vadd.f32 %v75, 1.0
    %v105 = vadd.f32 %v77, 1.0
    %v106 = vrcp.pop %v104
    %v107 = vrcp.pop %v105
    %vm108 = vcmp.ge.f32.partialorder %v66, 0.0
    %vm109 = vcmp.ge.f32.partialorder %v67, 0.0
    %v110 = vmul.f32 %v75, %v106
    %v111 = vmul.f32 %v77, %v107
    %v112 = vsel %vm108, %v106, %v110
    %v113 = vsel %vm109, %v107, %v111
    %v114 = vmul.f32 %v112, 2.0
    %v115 = vmul.f32 %v113, 2.0
    %v116 = vsub.f32 1.0, %v114
    %v117 = vsub.f32 1.0, %v115
    %v118 = vmul.f32 %v68, %v116
    %v119 = vmul.f32 %v69, %v117
    %v120 = vadd.f32 %v112, %v118
    %v121 = vadd.f32 %v113, %v119
    %v122 = vmul.f32 %v68, -0.5
    %v123 = vmul.f32 %v69, -0.5
    %v124 = vadd.f32 %v122, 0.75
    %v125 = vadd.f32 %v123, 0.75
    %v126 = vrsqrt.pop %v120
    %v127 = vmul.f32 %v120, %v126
    %vm128 = vcmp.eq.f32.partialorder %v120, inf
    %v129 = vsel %vm128, %v120, %v127
    %vm130 = vcmp.eq.f32.partialorder %v120, 0.0
    %v131 = vand.u32 %v120, 2147483648
    %v132 = vsel %vm130, %v131, %v129
    %v133 = vrsqrt.pop %v121
    %v134 = vmul.f32 %v121, %v133
    %vm135 = vcmp.eq.f32.partialorder %v121, inf
    %v136 = vsel %vm135, %v121, %v134
    %vm137 = vcmp.eq.f32.partialorder %v121, 0.0
    %v138 = vand.u32 %v121, 2147483648
    %v139 = vsel %vm137, %v138, %v136
    %v140 = vmul.f32 %v120, %v132
    %v141 = vmul.f32 %v121, %v139
    %v142 = vmul.f32 %v102, %v124
    %v143 = vmul.f32 %v103, %v125
    %v144 = vmul.f32 %v142, %v140
    %v145 = vmul.f32 %v143, %v141
    %s146 = sadd.s32 %s60, 1
    %s147 = smul.u32 %s146, 16
    %p148 = scmp.le.s32.totalorder %s147, 16
    // Predicated region
    $region22: #{tpu_custom_call.1} parent=1 // pred_check
      %p149 = pneg %p148
    $region23: #{tpu_custom_call.1} parent=1 // pred_check_branch
      %151 = sbr.rel (%p149) target = $region25
    $region24: #{tpu_custom_call.1} parent=1 // pred_region
      %v152 = vld [vmem:[#allocation7] sm:$0xff]
      %v153 = vadd.f32 %v144, %v145
      %v154 = vadd.f32 %v152, %v153
      %155 = vst [vmem:[#allocation7] sm:$0xff] %v154
    $region25: #{tpu_custom_call.1} parent=1 // pred_fallthru
      _
    %p156 = scmp.gt.s32.totalorder %s147, 16
    // Predicated region
    $region26: #{tpu_custom_call.1} parent=1 // pred_check
      %p157 = pneg %p156
    $region27: #{tpu_custom_call.1} parent=1 // pred_check_branch
      %159 = sbr.rel (%p157) target = $region29
    $region28: #{tpu_custom_call.1} parent=1 // pred_region
      %s160 = smul.u32 %s60, 16
      %v161 = vlaneseq
      %v162 = vshrl.u32 %v161, 7
      %v163 = vadd.s32 %v162, 8
      %v164 = vstv %s160
      %v165 = vadd.s32 %v164, %v162
      %v166 = vadd.s32 %v164, %v163
      %vm167 = vcmp.lt.s32.totalorder %v165, 16
      %vm168 = vcmp.lt.s32.totalorder %v166, 16
      %v169 = vsel %vm167, %v144, 0.0
      %v170 = vsel %vm168, %v145, 0.0
      %v171 = vld [vmem:[#allocation7] sm:$0xff]
      %v172 = vadd.f32 %v169, %v170
      %v173 = vadd.f32 %v171, %v172
      %174 = vst [vmem:[#allocation7] sm:$0xff] %v173
    $region29: #{tpu_custom_call.1} parent=1 // pred_fallthru
      _
    // Predicated region
    $region30: #{tpu_custom_call.1} parent=1 // pred_check
      _
    $region31: #{tpu_custom_call.1} parent=1 // pred_check_branch
      %176 = sbr.rel (0) target = $region33
    $region32: #{tpu_custom_call.1} parent=1 // pred_region
      %s178 = ssub.s32 128, 128
      %179 = vsyncadd [#allocation4], %s178
      %s181 = sshll.u32 [#allocation7], 4
      %s182 = int_to_ptr.vmem [resolvable:$true] %s181
      %184 = dma.vmem_to_hbm [thread:$0]  %s182, 128, %s2, [#allocation4]
    $region33: #{tpu_custom_call.1} parent=1 // pred_fallthru
      _
    // Predicated region
    $region34: #{tpu_custom_call.1} parent=1 // pred_check
      _
    $region35: #{tpu_custom_call.1} parent=1 // pred_check_branch
      %186 = sbr.rel (0) target = $region37
    $region36: #{tpu_custom_call.1} parent=1 // pred_region
      %187 = dma.done [#allocation4], 128
    $region37: #{tpu_custom_call.1} parent=1 // pred_fallthru
      _
    %188 = vsyncpa [#allocation3], 1
    %189 = vsyncpa [#allocation6], 1
    %190 = vsyncpa [#allocation4], 1

</llo_original>
